<compile_context>
chip_gen: v7x
topology: tpu7x:2x2x1
jax: 0.10.0
libtpu: 0.0.40
codegen_flags: <defaults>
</compile_context>

<pallas_src>
import math

import jax
import jax.numpy as jnp
from jax.experimental import pallas as pl
from jax.experimental.pallas import tpu as pltpu


_GELU_C = math.sqrt(2.0 / math.pi)
_VMEM_BUDGET = 48 << 20            # conservative working-set budget; fits v7x's 64 MiB/TC
_RESIDENT_WEIGHT_LIMIT = 36 << 20  # above this, tile the hidden axis instead of keeping W resident


def _gelu_tanh(h):
    # Module's GELU_ formula (tanh approximation); tanh goes to the EUP slot.
    # TODO(synk): nn.GELU's exact erf form differs from this approximation by <1e-3.
    return 0.5 * h * (1.0 + jnp.tanh(_GELU_C * (h + 0.044715 * (h * h * h))))


def _round_up(x: int, m: int) -> int:
    return ((x + m - 1) // m) * m


def _sublane(dtype) -> int:
    # Minimum sublane multiple for packed dtypes: f32 -> 8, bf16 -> 16, int8/fp8 -> 32.
    return 8 * max(1, 4 // jnp.dtype(dtype).itemsize)


# --------------------------------------------------------------------------- #
# Path A: both weight matrices VMEM-resident, 1-D row grid.
# --------------------------------------------------------------------------- #
def _ffn_kernel_resident(x_ref, w1_ref, b1_ref, w2_ref, b2_ref, o_ref):
    # First projection: native-dtype operands on the MXU, f32 accumulate.
    h = jnp.dot(x_ref[...], w1_ref[...], preferred_element_type=jnp.float32)
    h = h + b1_ref[...].astype(jnp.float32)
    h = _gelu_tanh(h)
    # dropout=0.0 -> identity. Cast back to input dtype so the 2nd dot is bf16 on bf16 models.
    h = h.astype(x_ref.dtype)
    o = jnp.dot(h, w2_ref[...], preferred_element_type=jnp.float32)
    o = o + b2_ref[...].astype(jnp.float32)
    o_ref[...] = o.astype(o_ref.dtype)


# --------------------------------------------------------------------------- #
# Path B: hidden axis tiled (for weights too large to keep VMEM-resident).
# --------------------------------------------------------------------------- #
def _ffn_kernel_hidden_tiled(x_ref, w1_ref, b1_ref, w2_ref, b2_ref, o_ref, acc_ref):
    k = pl.program_id(1)

    @pl.when(k == 0)
    def _():
        acc_ref[...] = jnp.zeros_like(acc_ref)

    h = jnp.dot(x_ref[...], w1_ref[...], preferred_element_type=jnp.float32)
    h = h + b1_ref[...].astype(jnp.float32)
    h = _gelu_tanh(h).astype(x_ref.dtype)
    acc_ref[...] += jnp.dot(h, w2_ref[...], preferred_element_type=jnp.float32)

    @pl.when(k == pl.num_programs(1) - 1)
    def _():
        o_ref[...] = (acc_ref[...] + b2_ref[...].astype(jnp.float32)).astype(o_ref.dtype)


def feed_forward(x, w1, b1, w2, b2, *, tile_m: int | None = None):
    """y = gelu(x @ w1 + b1) @ w2 + b2, fused in a single Pallas kernel.

    x:  (..., dim)
    w1: (dim, hidden)   b1: (hidden,)
    w2: (hidden, dim)   b2: (dim,)
    """
    orig_shape = x.shape
    dim = int(orig_shape[-1])
    hidden = int(w1.shape[1])
    assert w1.shape == (dim, hidden)
    assert w2.shape == (hidden, dim)
    assert b1.shape == (hidden,) and b2.shape == (dim,)

    n = 1
    for s in orig_shape[:-1]:
        n *= int(s)
    x2 = x.reshape(n, dim)

    xsz = jnp.dtype(x.dtype).itemsize
    wsz = jnp.dtype(w1.dtype).itemsize
    sub = _sublane(x.dtype)

    b1r = b1.reshape(1, hidden)
    b2r = b2.reshape(1, dim)
    w_bytes = 2 * dim * hidden * wsz  # W1 + W2 (single-buffered)

    if w_bytes <= _RESIDENT_WEIGHT_LIMIT:
        # ---------------- Path A: weights resident in VMEM ----------------
        # Per-row VMEM cost: double-buffered in/out tiles + f32 intermediate + its cast.
        per_row = 4 * dim * xsz + hidden * (4 + xsz)
        remaining = _VMEM_BUDGET - w_bytes - (hidden + dim) * wsz
        tm_cap = max(sub, (max(remaining, 0) // max(per_row, 1)) // sub * sub)
        tm = 512 if tile_m is None else tile_m
        tm = max(sub, min(_round_up(tm, sub), tm_cap, _round_up(n, sub)))

        grid = (pl.cdiv(n, tm),)
        need = w_bytes + (hidden + dim) * wsz + tm * per_row
        vmem_limit = min(max(int(need * 1.25) + (2 << 20), 16 << 20), 64 << 20)

        out = pl.pallas_call(
            _ffn_kernel_resident,
            out_shape=jax.ShapeDtypeStruct((n, dim), x.dtype),
            grid=grid,
            in_specs=[
                # x row tile: pipelined (double-buffered) across the row grid.
                pl.BlockSpec((tm, dim), lambda i: (i, 0)),
                # Weights/biases: constant index_map + single buffer -> truly resident.
                pl.BlockSpec((dim, hidden), lambda i: (0, 0), pipeline_mode=pl.Buffered(1)),
                pl.BlockSpec((1, hidden), lambda i: (0, 0), pipeline_mode=pl.Buffered(1)),
                pl.BlockSpec((hidden, dim), lambda i: (0, 0), pipeline_mode=pl.Buffered(1)),
                pl.BlockSpec((1, dim), lambda i: (0, 0), pipeline_mode=pl.Buffered(1)),
            ],
            out_specs=pl.BlockSpec((tm, dim), lambda i: (i, 0)),
            input_output_aliases={0: 0},  # x row tile is dead once its output tile exists
            compiler_params=pltpu.CompilerParams(
                dimension_semantics=("parallel",),
                vmem_limit_bytes=vmem_limit,
            ),
        )(x2, w1, b1r, w2, b2r)
    else:
        # -------- Path B: tile the hidden axis, accumulate into scratch --------
        tm = 256 if tile_m is None else tile_m
        tm = max(sub, min(_round_up(tm, sub), _round_up(n, sub)))

        def _need_bytes(th_):
            return (4 * dim * th_ * wsz     # W1 + W2 blocks, double-buffered
                    + 2 * th_ * wsz         # b1 block, double-buffered
                    + dim * wsz             # b2 (resident)
                    + 4 * tm * dim * xsz    # in/out tiles, double-buffered
                    + tm * dim * 4          # f32 accumulator scratch
                    + tm * th_ * (4 + xsz)) # f32 hidden intermediate + its cast

        th = min(_round_up(hidden, 128), 2048)
        while th > 128 and _need_bytes(th) > _VMEM_BUDGET:
            th -= 128
        th = max(th, 128)

        # Zero-pad the hidden axis of the weights (weights only; cheap) so the
        # ragged last hidden tile contributes exactly zero to the accumulator.
        hp = _round_up(hidden, th)
        if hp != hidden:
            w1p = jnp.pad(w1, ((0, 0), (0, hp - hidden)))
            b1p = jnp.pad(b1r, ((0, 0), (0, hp - hidden)))
            w2p = jnp.pad(w2, ((0, hp - hidden), (0, 0)))
        else:
            w1p, b1p, w2p = w1, b1r, w2

        grid = (pl.cdiv(n, tm), hp // th)
        vmem_limit = min(max(int(_need_bytes(th) * 1.25) + (2 << 20), 16 << 20), 64 << 20)

        out = pl.pallas_call(
            _ffn_kernel_hidden_tiled,
            out_shape=jax.ShapeDtypeStruct((n, dim), x.dtype),
            grid=grid,
            in_specs=[
                pl.BlockSpec((tm, dim), lambda i, k: (i, 0)),   # x tile (re-used across k)
                pl.BlockSpec((dim, th), lambda i, k: (0, k)),   # W1 hidden slab (pipelined)
                pl.BlockSpec((1, th), lambda i, k: (0, k)),     # b1 hidden slab
                pl.BlockSpec((th, dim), lambda i, k: (k, 0)),   # W2 hidden slab (pipelined)
                pl.BlockSpec((1, dim), lambda i, k: (0, 0), pipeline_mode=pl.Buffered(1)),
            ],
            out_specs=pl.BlockSpec((tm, dim), lambda i, k: (i, 0)),
            scratch_shapes=[pltpu.VMEM((tm, dim), jnp.float32)],
            input_output_aliases={0: 0},
            compiler_params=pltpu.CompilerParams(
                dimension_semantics=("parallel", "arbitrary"),
                vmem_limit_bytes=vmem_limit,
            ),
        )(x2, w1p, b1p, w2p, b2r)

    return out.reshape(orig_shape)


if __name__ == "__main__":
    key = jax.random.PRNGKey(0)
    B, S, DIM, MULT = 2, 8, 32, 4
    HIDDEN = DIM * MULT

    kx, k1, kb1, k2, kb2 = jax.random.split(key, 5)
    x = jax.random.normal(kx, (B, S, DIM), dtype=jnp.float32)
    # nn.Linear-style uniform(-1/sqrt(fan_in), 1/sqrt(fan_in)) init.
    lim1 = 1.0 / math.sqrt(DIM)
    lim2 = 1.0 / math.sqrt(HIDDEN)
    w1 = jax.random.uniform(k1, (DIM, HIDDEN), jnp.float32, -lim1, lim1)
    b1 = jax.random.uniform(kb1, (HIDDEN,), jnp.float32, -lim1, lim1)
    w2 = jax.random.uniform(k2, (HIDDEN, DIM), jnp.float32, -lim2, lim2)
    b2 = jax.random.uniform(kb2, (DIM,), jnp.float32, -lim2, lim2)

    ffn = jax.jit(feed_forward)
    y = jax.block_until_ready(ffn(x, w1, b1, w2, b2))

    # Pure-JAX reference (same tanh-GELU as the module's GELU_ formula).
    h = jnp.dot(x, w1, precision=jax.lax.Precision.HIGHEST) + b1
    a = 0.5 * h * (1.0 + jnp.tanh(_GELU_C * (h + 0.044715 * h ** 3)))
    y_ref = jnp.dot(a, w2, precision=jax.lax.Precision.HIGHEST) + b2

    assert y.shape == x.shape and y.dtype == x.dtype
    err = float(jnp.max(jnp.abs(y - y_ref)))
    assert jnp.allclose(y, y_ref, atol=1e-4, rtol=1e-4), err

    print("KERNEL_OK")
</pallas_src>

<mosaic_0001>
module attributes {stable_mosaic.version = 11 : i64} {
  func.func @_ffn_kernel_resident(%arg0: i32, %arg1: memref<16x32xf32, #tpu.memory_space<vmem>>, %arg2: memref<32x128xf32, #tpu.memory_space<vmem>>, %arg3: memref<1x128xf32, #tpu.memory_space<vmem>>, %arg4: memref<128x32xf32, #tpu.memory_space<vmem>>, %arg5: memref<1x32xf32, #tpu.memory_space<vmem>>, %arg6: memref<16x32xf32, #tpu.memory_space<vmem>>) attributes {dimension_semantics = [#tpu.dimension_semantics<parallel>], iteration_bounds = array<i64: 1>, scalar_prefetch = 0 : i64, scratch_operands = 0 : i64, tpu.core_type = #tpu.core_type<tc>, window_params = [{transform_indices = @transform_0, window_bounds = array<i64: 16, 32>}, {pipeline_mode = #tpu.pipeline_mode<synchronous>, transform_indices = @transform_1, window_bounds = array<i64: 32, 128>}, {pipeline_mode = #tpu.pipeline_mode<synchronous>, transform_indices = @transform_2, window_bounds = array<i64: 1, 128>}, {pipeline_mode = #tpu.pipeline_mode<synchronous>, transform_indices = @transform_3, window_bounds = array<i64: 128, 32>}, {pipeline_mode = #tpu.pipeline_mode<synchronous>, transform_indices = @transform_4, window_bounds = array<i64: 1, 32>}, {transform_indices = @transform_5, window_bounds = array<i64: 16, 32>}]} {
    %c0 = arith.constant 0 : index
    %c0_0 = arith.constant 0 : index
    %0 = vector.load %arg1[%c0, %c0_0] : memref<16x32xf32, #tpu.memory_space<vmem>>, vector<16x32xf32>
    %c0_1 = arith.constant 0 : index
    %c0_2 = arith.constant 0 : index
    %1 = vector.load %arg2[%c0_1, %c0_2] : memref<32x128xf32, #tpu.memory_space<vmem>>, vector<32x128xf32>
    %cst = arith.constant dense<0.000000e+00> : vector<16x128xf32>
    %2 = tpu.matmul %0, %1, %cst {dimension_numbers = #tpu.dot_dimension_numbers<[1], [0], [0], [1], [0, 0, 1, 1], [], []>} : vector<16x32xf32>, vector<32x128xf32>, vector<16x128xf32> -> vector<16x128xf32>
    %c0_3 = arith.constant 0 : index
    %c0_4 = arith.constant 0 : index
    %3 = vector.load %arg3[%c0_3, %c0_4] : memref<1x128xf32, #tpu.memory_space<vmem>>, vector<1x128xf32>
    %4 = vector.broadcast %3 : vector<1x128xf32> to vector<16x128xf32>
    %5 = arith.addf %2, %4 : vector<16x128xf32>
    %cst_5 = arith.constant 5.000000e-01 : f32
    %6 = vector.broadcast %cst_5 : f32 to vector<16x128xf32>
    %7 = arith.mulf %6, %5 : vector<16x128xf32>
    %8 = arith.mulf %5, %5 : vector<16x128xf32>
    %9 = arith.mulf %8, %5 : vector<16x128xf32>
    %cst_6 = arith.constant 4.471500e-02 : f32
    %10 = vector.broadcast %cst_6 : f32 to vector<16x128xf32>
    %11 = arith.mulf %10, %9 : vector<16x128xf32>
    %12 = arith.addf %5, %11 : vector<16x128xf32>
    %cst_7 = arith.constant 0.797884583 : f32
    %13 = vector.broadcast %cst_7 : f32 to vector<16x128xf32>
    %14 = arith.mulf %13, %12 : vector<16x128xf32>
    %15 = math.tanh %14 : vector<16x128xf32>
    %cst_8 = arith.constant 1.000000e+00 : f32
    %16 = vector.broadcast %cst_8 : f32 to vector<16x128xf32>
    %17 = arith.addf %16, %15 : vector<16x128xf32>
    %18 = arith.mulf %7, %17 : vector<16x128xf32>
    %c0_9 = arith.constant 0 : index
    %c0_10 = arith.constant 0 : index
    %19 = vector.load %arg4[%c0_9, %c0_10] : memref<128x32xf32, #tpu.memory_space<vmem>>, vector<128x32xf32>
    %cst_11 = arith.constant dense<0.000000e+00> : vector<16x32xf32>
    %20 = tpu.matmul %18, %19, %cst_11 {dimension_numbers = #tpu.dot_dimension_numbers<[1], [0], [0], [1], [0, 0, 1, 1], [], []>} : vector<16x128xf32>, vector<128x32xf32>, vector<16x32xf32> -> vector<16x32xf32>
    %c0_12 = arith.constant 0 : index
    %c0_13 = arith.constant 0 : index
    %21 = vector.load %arg5[%c0_12, %c0_13] : memref<1x32xf32, #tpu.memory_space<vmem>>, vector<1x32xf32>
    %22 = vector.broadcast %21 : vector<1x32xf32> to vector<16x32xf32>
    %23 = arith.addf %20, %22 : vector<16x32xf32>
    %c0_14 = arith.constant 0 : index
    %c0_15 = arith.constant 0 : index
    %24 = vector.load %arg6[%c0_14, %c0_15] : memref<16x32xf32, #tpu.memory_space<vmem>>, vector<16x32xf32>
    tpu.vector_store %arg6[%c0_14, %c0_15], %23 {strides = array<i32>} : memref<16x32xf32, #tpu.memory_space<vmem>>, vector<16x32xf32>,
    return
  }
  func.func @transform_0(%arg0: i32) -> (i32, i32) {
    %c0_i32 = arith.constant 0 : i32
    %c0_i32_0 = arith.constant 0 : i32
    return %arg0, %c0_i32 : i32, i32
  }
  func.func @transform_1(%arg0: i32) -> (i32, i32) {
    %c0_i32 = arith.constant 0 : i32
    %c0_i32_0 = arith.constant 0 : i32
    %c0_i32_1 = arith.constant 0 : i32
    return %c0_i32, %c0_i32_0 : i32, i32
  }
  func.func @transform_2(%arg0: i32) -> (i32, i32) {
    %c0_i32 = arith.constant 0 : i32
    %c0_i32_0 = arith.constant 0 : i32
    %c0_i32_1 = arith.constant 0 : i32
    return %c0_i32, %c0_i32_0 : i32, i32
  }
  func.func @transform_3(%arg0: i32) -> (i32, i32) {
    %c0_i32 = arith.constant 0 : i32
    %c0_i32_0 = arith.constant 0 : i32
    %c0_i32_1 = arith.constant 0 : i32
    return %c0_i32, %c0_i32_0 : i32, i32
  }
  func.func @transform_4(%arg0: i32) -> (i32, i32) {
    %c0_i32 = arith.constant 0 : i32
    %c0_i32_0 = arith.constant 0 : i32
    %c0_i32_1 = arith.constant 0 : i32
    return %c0_i32, %c0_i32_0 : i32, i32
  }
  func.func @transform_5(%arg0: i32) -> (i32, i32) {
    %c0_i32 = arith.constant 0 : i32
    %c0_i32_0 = arith.constant 0 : i32
    return %arg0, %c0_i32 : i32, i32
  }
}

</mosaic_0001>

<llo_original>
// kernel: feed_forward.1
$region0: #{feed_forward.1}
  #allocation0 [shape = 'u32[]', space=smem, size = 0x4, offset = 0x4, fixed_abs, tag = 'smem constant byte address 0x4 - core index']
  #allocation1 [shape = 'u32[144,128]{1,0:T(1,128)}', space=vmem, size = 0x12000, scoped, tag = 'internal scratch']
  %s0 = inlined_call_operand.vmem [shape: f32[16,32], index: 0, kind: input, shape index: {}, may-alias: {0,5}]
  %s1 = inlined_call_operand.vmem [shape: f32[32,128], index: 1, kind: input, shape index: {}]
  %s2 = inlined_call_operand.vmem [shape: f32[1,128], index: 2, kind: input, shape index: {}]
  %s3 = inlined_call_operand.vmem [shape: f32[128,32], index: 3, kind: input, shape index: {}]
  %s4 = inlined_call_operand.vmem [shape: f32[1,32], index: 4, kind: input, shape index: {}]
  %s5 = inlined_call_operand.vmem [shape: f32[16,32], index: 5, kind: output, shape index: {}, may-alias: {0,5}]
  %s6 = sld [smem:[#allocation0]]
  $region30: #{feed_forward.1} parent=0
    _
  %s8 = ssub.s32 1, %s6
  %s9 = scalar_select 0, %s8, %s6
  // Predicated region
  $region2: #{feed_forward.1} parent=0 // pred_check
    _
  $region3: #{feed_forward.1} parent=0 // pred_check_branch
    %11 = sbr.rel (0) target = $region5
  $region4: #{feed_forward.1} parent=0 // pred_region
    _
  $region5: #{feed_forward.1} parent=0 // pred_fallthru
    _
  // Predicated region
  $region6: #{feed_forward.1} parent=0 // pred_check
    _
  $region7: #{feed_forward.1} parent=0 // pred_check_branch
    %13 = sbr.rel (0) target = $region9
  $region8: #{feed_forward.1} parent=0 // pred_region
    _
  $region9: #{feed_forward.1} parent=0 // pred_fallthru
    _
  // Predicated region
  $region10: #{feed_forward.1} parent=0 // pred_check
    _
  $region11: #{feed_forward.1} parent=0 // pred_check_branch
    %15 = sbr.rel (0) target = $region13
  $region12: #{feed_forward.1} parent=0 // pred_region
    _
  $region13: #{feed_forward.1} parent=0 // pred_fallthru
    _
  // Predicated region
  $region14: #{feed_forward.1} parent=0 // pred_check
    _
  $region15: #{feed_forward.1} parent=0 // pred_check_branch
    %17 = sbr.rel (0) target = $region17
  $region16: #{feed_forward.1} parent=0 // pred_region
    _
  $region17: #{feed_forward.1} parent=0 // pred_fallthru
    _
  // Predicated region
  $region18: #{feed_forward.1} parent=0 // pred_check
    _
  $region19: #{feed_forward.1} parent=0 // pred_check_branch
    %19 = sbr.rel (0) target = $region21
  $region20: #{feed_forward.1} parent=0 // pred_region
    _
  $region21: #{feed_forward.1} parent=0 // pred_fallthru
    _
  %v20 = vld [vmem:[%s0] sm:$0xff]
  %v21 = vld [vmem:[%s0 + $0x8] sm:$0xff]
  %v22 = vld [vmem:[%s1] sm:$0xff]
  %v23 = vld [vmem:[%s1 + $0x8] sm:$0xff]
  %v24 = vld [vmem:[%s1 + $0x10] sm:$0xff]
  %v25 = vld [vmem:[%s1 + $0x18] sm:$0xff]
  %v26 = vld [vmem:[%s2] sm:$0x1]
  %v28 = vlaneseq
  %v29 = vshrl.u32 %v28, 7
  %v30 = vsub.s32 0, %v29
  %v31 = vrot.slane %v26, %v30
  %vm33 = vcmask 261120
  %v35 = vsel %vm33, %v20, 0
  %v38 = vsel %vm33, %v21, 0
  %40 = vmatprep.subr.mxu0 0.0
  %41 = vmatpush1.msra.mxu0 %v22
  %42 = vmatprep.subr.mxu0 0.0
  %43 = vmatpush1.msra.mxu0 %v23
  %44 = vmatprep.subr.mxu0 0.0
  %45 = vmatpush1.msra.mxu0 %v24
  %46 = vmatprep.subr.mxu0 0.0
  %47 = vmatpush1.msra.mxu0 %v25
  %48 = vmatprep.subr.mxu0 0.0
  %49 = vmatpush1.msra.mxu0 0.0
  %50 = vmatprep.subr.mxu0 0.0
  %51 = vmatpush1.msra.mxu0 0.0
  %52 = vmatprep.subr.mxu0 0.0
  %53 = vmatpush1.msra.mxu0 0.0
  %54 = vmatprep.subr.mxu0 0.0
  %55 = vmatpush1.msra.mxu0 0.0
  %56 = vmatprep.subr.mxu0 0.0
  %57 = vmatpush1.msra.mxu0 0.0
  %58 = vmatprep.subr.mxu0 0.0
  %59 = vmatpush1.msra.mxu0 0.0
  %60 = vmatprep.subr.mxu0 0.0
  %61 = vmatpush1.msra.mxu0 0.0
  %62 = vmatprep.subr.mxu0 0.0
  %63 = vmatpush1.msra.mxu0 0.0
  %64 = vmatprep.subr.mxu0 0.0
  %65 = vmatpush1.msra.mxu0 0.0
  %66 = vmatprep.subr.mxu0 0.0
  %67 = vmatpush1.msra.mxu0 0.0
  %68 = vmatprep.subr.mxu0 0.0
  %69 = vmatpush1.msra.mxu0 0.0
  %70 = vmatprep.subr.mxu0 0.0
  %71 = vmatpush1.msra.mxu0 0.0
  %72 = vmatprep.subr.mxu0 0.0
  %73 = vmatpush1.msra.mxu0 0.0
  %74 = vmatprep.subr.mxu0 0.0
  %75 = vmatpush1.msra.mxu0 0.0
  %76 = vmatprep.subr.mxu0 0.0
  %77 = vmatpush1.msra.mxu0 0.0
  %78 = vmatprep.subr.mxu0 0.0
  %79 = vmatpush1.msra.mxu0 0.0
  %80 = vmatprep.subr.mxu0 0.0
  %81 = vmatpush1.msra.mxu0 0.0
  %82 = vmatprep.subr.mxu0 0.0
  %83 = vmatpush1.msra.mxu0 0.0
  %84 = vmatprep.subr.mxu0 0.0
  %85 = vmatpush1.msra.mxu0 0.0
  %86 = vmatprep.subr.mxu0 0.0
  %87 = vmatpush1.msra.mxu0 0.0
  %88 = vmatprep.subr.mxu0 0.0
  %89 = vmatpush1.msra.mxu0 0.0
  %90 = vmatprep.subr.mxu0 0.0
  %91 = vmatpush1.msra.mxu0 0.0
  %92 = vmatprep.subr.mxu0 0.0
  %93 = vmatpush1.msra.mxu0 0.0
  %94 = vmatprep.subr.mxu0 0.0
  %95 = vmatpush1.msra.mxu0 0.0
  %96 = vmatprep.subr.mxu0 0.0
  %97 = vmatpush1.msra.mxu0 0.0
  %98 = vmatprep.subr.mxu0 0.0
  %99 = vmatpush1.msra.mxu0 0.0
  %100 = vmatprep.subr.mxu0 0.0
  %101 = vmatpush1.msra.mxu0 0.0
  %102 = vmatprep.subr.mxu0 0.0
  %103 = vmatpush1.msra.mxu0 0.0
  %104 = vmatprep.mubr.f32.mxu0 0.0
  %105 = vmatmul.mubr.f32.gmra.mrb[0].mxu0 %v35
  %v106 = vpop.f32.mrb[0].mxu0
  %v107 = vadd.f32 %v31, %v106
  %v108 = vpop.f32.mrb[0].mxu0
  %109 = vmatprep.mubr.f32.mxu0 0.0
  %110 = vmatmul.mubr.f32.gmra.mrb[0].mxu0 %v38
  %v111 = vpop.f32.mrb[0].mxu0
  %v112 = vadd.f32 %v31, %v111
  %v113 = vpop.f32.mrb[0].mxu0
  %114 = vdwg.mxu0
  %v115 = vmul.f32 %v107, 0.5
  %v116 = vmul.f32 %v112, 0.5
  %v117 = vmul.f32 %v107, %v107
  %v118 = vmul.f32 %v112, %v112
  %v119 = vmul.f32 %v117, %v107
  %v120 = vmul.f32 %v118, %v112
  %v121 = vmul.f32 %v119, 0.044715
  %v122 = vmul.f32 %v120, 0.044715
  %v123 = vadd.f32 %v107, %v121
  %v124 = vadd.f32 %v112, %v122
  %v125 = vmul.f32 %v123, 0.7978846
  %v126 = vmul.f32 %v124, 0.7978846
  %v127 = vtanh.pop %v125
  %v128 = vtanh.pop %v126
  %v129 = vadd.f32 %v127, 1.0
  %v130 = vadd.f32 %v128, 1.0
  %v131 = vmul.f32 %v115, %v129
  %v132 = vmul.f32 %v116, %v130
  %v133 = vld [vmem:[%s3] sm:$0xff]
  %v134 = vld [vmem:[%s3 + $0x8] sm:$0xff]
  %v135 = vld [vmem:[%s3 + $0x10] sm:$0xff]
  %v136 = vld [vmem:[%s3 + $0x18] sm:$0xff]
  %v137 = vld [vmem:[%s3 + $0x20] sm:$0xff]
  %v138 = vld [vmem:[%s3 + $0x28] sm:$0xff]
  %v139 = vld [vmem:[%s3 + $0x30] sm:$0xff]
  %v140 = vld [vmem:[%s3 + $0x38] sm:$0xff]
  %v141 = vld [vmem:[%s3 + $0x40] sm:$0xff]
  %v142 = vld [vmem:[%s3 + $0x48] sm:$0xff]
  %v143 = vld [vmem:[%s3 + $0x50] sm:$0xff]
  %v144 = vld [vmem:[%s3 + $0x58] sm:$0xff]
  %v145 = vld [vmem:[%s3 + $0x60] sm:$0xff]
  %v146 = vld [vmem:[%s3 + $0x68] sm:$0xff]
  %v147 = vld [vmem:[%s3 + $0x70] sm:$0xff]
  %v148 = vld [vmem:[%s3 + $0x78] sm:$0xff]
  %v149 = vld [vmem:[%s4] sm:$0x1]
  %v151 = vlaneseq
  %v152 = vshrl.u32 %v151, 7
  %v153 = vsub.s32 0, %v152
  %v154 = vrot.slane %v149, %v153
  %156 = vmatprep.subr.mxu0 0.0
  %157 = vmatpush1.msra.mxu0 %v133
  %158 = vmatprep.subr.mxu0 0.0
  %159 = vmatpush1.msra.mxu0 %v134
  %160 = vmatprep.subr.mxu0 0.0
  %161 = vmatpush1.msra.mxu0 %v135
  %162 = vmatprep.subr.mxu0 0.0
  %163 = vmatpush1.msra.mxu0 %v136
  %164 = vmatprep.subr.mxu0 0.0
  %165 = vmatpush1.msra.mxu0 %v137
  %166 = vmatprep.subr.mxu0 0.0
  %167 = vmatpush1.msra.mxu0 %v138
  %168 = vmatprep.subr.mxu0 0.0
  %169 = vmatpush1.msra.mxu0 %v139
  %170 = vmatprep.subr.mxu0 0.0
  %171 = vmatpush1.msra.mxu0 %v140
  %172 = vmatprep.subr.mxu0 0.0
  %173 = vmatpush1.msra.mxu0 %v141
  %174 = vmatprep.subr.mxu0 0.0
  %175 = vmatpush1.msra.mxu0 %v142
  %176 = vmatprep.subr.mxu0 0.0
  %177 = vmatpush1.msra.mxu0 %v143
  %178 = vmatprep.subr.mxu0 0.0
  %179 = vmatpush1.msra.mxu0 %v144
  %180 = vmatprep.subr.mxu0 0.0
  %181 = vmatpush1.msra.mxu0 %v145
  %182 = vmatprep.subr.mxu0 0.0
  %183 = vmatpush1.msra.mxu0 %v146
  %184 = vmatprep.subr.mxu0 0.0
  %185 = vmatpush1.msra.mxu0 %v147
  %186 = vmatprep.subr.mxu0 0.0
  %187 = vmatpush1.msra.mxu0 %v148
  %188 = vmatprep.subr.mxu0 0.0
  %189 = vmatpush1.msra.mxu0 0.0
  %190 = vmatprep.subr.mxu0 0.0
  %191 = vmatpush1.msra.mxu0 0.0
  %192 = vmatprep.subr.mxu0 0.0
  %193 = vmatpush1.msra.mxu0 0.0
  %194 = vmatprep.subr.mxu0 0.0
  %195 = vmatpush1.msra.mxu0 0.0
  %196 = vmatprep.subr.mxu0 0.0
  %197 = vmatpush1.msra.mxu0 0.0
  %198 = vmatprep.subr.mxu0 0.0
  %199 = vmatpush1.msra.mxu0 0.0
  %200 = vmatprep.subr.mxu0 0.0
  %201 = vmatpush1.msra.mxu0 0.0
  %202 = vmatprep.subr.mxu0 0.0
  %203 = vmatpush1.msra.mxu0 0.0
  %204 = vmatprep.subr.mxu0 0.0
  %205 = vmatpush1.msra.mxu0 0.0
  %206 = vmatprep.subr.mxu0 0.0
  %207 = vmatpush1.msra.mxu0 0.0
  %208 = vmatprep.subr.mxu0 0.0
  %209 = vmatpush1.msra.mxu0 0.0
  %210 = vmatprep.subr.mxu0 0.0
  %211 = vmatpush1.msra.mxu0 0.0
  %212 = vmatprep.subr.mxu0 0.0
  %213 = vmatpush1.msra.mxu0 0.0
  %214 = vmatprep.subr.mxu0 0.0
  %215 = vmatpush1.msra.mxu0 0.0
  %216 = vmatprep.subr.mxu0 0.0
  %217 = vmatpush1.msra.mxu0 0.0
  %218 = vmatprep.subr.mxu0 0.0
  %219 = vmatpush1.msra.mxu0 0.0
  %220 = vmatprep.mubr.f32.mxu0 0.0
  %221 = vmatmul.mubr.f32.gmra.mrb[0].mxu0 %v131
  %v222 = vpop.f32.mrb[0].mxu0
  %v223 = vadd.f32 %v154, %v222
  %v224 = vpop.f32.mrb[0].mxu0
  %225 = vmatprep.mubr.f32.mxu0 0.0
  %226 = vmatmul.mubr.f32.gmra.mrb[0].mxu0 %v132
  %v227 = vpop.f32.mrb[0].mxu0
  %v228 = vadd.f32 %v154, %v227
  %v229 = vpop.f32.mrb[0].mxu0
  %230 = vdwg.mxu0
  %231 = vst.msk [vmem:[%s5] sm:$0xff] %vm33, %v223
  %232 = vst.msk [vmem:[%s5 + $0x8] sm:$0xff] %vm33, %v228
  // Predicated region
  $region22: #{feed_forward.1} parent=0 // pred_check
    _
  $region23: #{feed_forward.1} parent=0 // pred_check_branch
    %234 = sbr.rel (0) target = $region25
  $region24: #{feed_forward.1} parent=0 // pred_region
    _
  $region25: #{feed_forward.1} parent=0 // pred_fallthru
    _
  // Predicated region
  $region26: #{feed_forward.1} parent=0 // pred_check
    _
  $region27: #{feed_forward.1} parent=0 // pred_check_branch
    %236 = sbr.rel (0) target = $region29
  $region28: #{feed_forward.1} parent=0 // pred_region
    _
  $region29: #{feed_forward.1} parent=0 // pred_fallthru
    _

</llo_original>
